<compile_context>
chip_gen: v6e
topology: v6e:2x2x1
jax: 0.10.0
libtpu: 0.0.40
codegen_flags: <defaults>
</compile_context>

<pallas_src>
import math

import jax
import jax.numpy as jnp
from jax.experimental import pallas as pl
from jax.experimental.pallas import tpu as pltpu

_LANE = 128


def _weight_sparse1_kernel(x_ref, w_ref, o_ref):
    # (TB, TF) * (1, TF) broadcast multiply on the VPU.
    o_ref[...] = x_ref[...] * w_ref[...]


def _sublane_multiple(itemsize: int) -> int:
    # Sub-32-bit dtypes pack along sublanes: f32 -> 8, bf16 -> 16, i8/fp8 -> 32.
    return max(8, 8 * (4 // max(1, itemsize)))


def _vmem_budget_bytes() -> int:
    # Generation-aware budget: ~3/4 of physical VMEM (v5e/v6e 128 MiB -> 96,
    # v7x 64 MiB/TC -> 48). Conservative default if the query is unavailable.
    try:
        cap = int(pltpu.get_tpu_info().vmem_capacity_bytes)
    except Exception:
        cap = 64 * 1024 * 1024
    return (3 * cap) // 4


def _pick_tiles(B, F, itemsize, budget):
    """Pick (tb, tf) so 2x(x)+2x(out) tiles stay well under `budget` bytes."""
    sub = _sublane_multiple(itemsize)
    # Target x-tile of a few MiB; x + out, each double-buffered, is 4x that.
    target_x_bytes = min(8 * 1024 * 1024, max(budget // 8, 1024 * 1024))

    # Huge-F guard: split the feature axis (multiples of 128 lanes) when even
    # a minimum-height full-width tile would blow the budget.
    tf = F
    if F % _LANE == 0 and 4 * sub * F * itemsize > budget:
        tf = max(_LANE, ((target_x_bytes // (sub * itemsize)) // _LANE) * _LANE)
        tf = min(tf, F)

    # Batch tile sized by bytes (no arbitrary row cap).
    tb = target_x_bytes // max(1, tf * itemsize)

    # Keep >= 8 grid steps over batch for non-trivial inputs: pipeline depth
    # plus work for both v7x TensorCores.
    if B * F * itemsize > 2 * 1024 * 1024:
        tb = min(tb, max(1, B // 8))

    if tb >= B:
        tb = B  # full-dim block is always legal
    else:
        tb = max(sub, (tb // sub) * sub)  # dtype-aware sublane rounding
        tb = min(tb, B)
    return int(tb), int(tf)


def _pallas_bcast_mul(x2d, w1d):
    """out[b, f] = x2d[b, f] * w1d[f], tiled and software-pipelined."""
    B, F = x2d.shape
    itemsize = jnp.dtype(x2d.dtype).itemsize
    budget = _vmem_budget_bytes()
    tb, tf = _pick_tiles(B, F, itemsize, budget)
    grid = (pl.cdiv(B, tb), pl.cdiv(F, tf))
    w2d = w1d.reshape(1, F)

    return pl.pallas_call(
        _weight_sparse1_kernel,
        out_shape=jax.ShapeDtypeStruct((B, F), x2d.dtype),
        grid_spec=pltpu.PrefetchScalarGridSpec(
            num_scalar_prefetch=0,
            grid=grid,
            in_specs=[
                pl.BlockSpec((tb, tf), lambda i, j: (i, j)),
                # Constant batch index: the (1, tf) weight row is DMA'd once
                # per feature tile and stays VMEM-resident across batch steps.
                pl.BlockSpec((1, tf), lambda i, j: (0, j)),
            ],
            out_specs=pl.BlockSpec((tb, tf), lambda i, j: (i, j)),
        ),
        compiler_params=pltpu.CompilerParams(
            # All tiles are independent -> both axes parallel (v7x can shard
            # the batch axis across its 2 TensorCores).
            # TODO(synk): use pltpu.CORE_PARALLEL on the batch axis once
            # generation detection is plumbed; PARALLEL is safe on all gens.
            dimension_semantics=(pltpu.PARALLEL, pltpu.PARALLEL),
            vmem_limit_bytes=int(budget),
        ),
        cost_estimate=pl.CostEstimate(
            flops=int(B) * int(F),
            transcendentals=0,
            bytes_accessed=2 * int(B) * int(F) * int(itemsize)
            + int(F) * int(itemsize),
        ),
    )(x2d, w2d)


def weight_sparse1_forward(x: jax.Array, weight: jax.Array,
                           *, force_pallas: bool = False) -> jax.Array:
    """Elementwise multiply of x (..., in_nodes) by weight (in_nodes,)."""
    F = x.shape[-1]
    assert weight.shape == (F,)
    # Wrapper-side cast (no in-kernel VALU cast). For bf16 x this multiplies
    # in bf16 rather than PyTorch's promote-to-f32 broadcast multiply.
    weight = weight.astype(x.dtype)
    x2d = x.reshape(-1, F)
    B = x2d.shape[0]
    itemsize = jnp.dtype(x.dtype).itemsize
    total = B * F

    # Tiny inputs: pallas launch/per-step overhead dominates below ~1 MiB;
    # let XLA fuse the plain broadcast multiply instead.
    if not force_pallas and total * itemsize < (1 << 20):
        return (x2d * weight[None, :]).reshape(x.shape)

    if F % _LANE != 0:
        # Lane-dense repack: fold the row-major flat stream into rows of
        # lcm(F, 128) so every store is a full-width unmasked vst; pad the
        # tail when the fold is not exact (still beats width-F masked stores,
        # especially on v5e's single store slot). Weight is tiled to match.
        packed = (F * _LANE) // math.gcd(F, _LANE)  # lcm(F, 128)
        wp = jnp.tile(weight, packed // F)
        rem = total % packed
        flat = x2d.reshape(total)
        if rem != 0:
            flat = jnp.pad(flat, (0, packed - rem))
        xp = flat.reshape(flat.shape[0] // packed, packed)
        out = _pallas_bcast_mul(xp, wp).reshape(-1)
        if rem != 0:
            out = out[:total]
        return out.reshape(x.shape)

    return _pallas_bcast_mul(x2d, weight).reshape(x.shape)


def make_weight(in_nodes: int, key) -> jax.Array:
    """Deterministic stand-in for model_reg.coef_.reshape(-1)[:in_nodes]."""
    coef = jax.random.normal(key, (4 * in_nodes,), dtype=jnp.float32)
    return coef[:in_nodes]


if __name__ == "__main__":
    key = jax.random.PRNGKey(0)
    k1, k2, k3, k4, k5, k6, k7, k8 = jax.random.split(key, 8)

    # Faithful tiny GENet shapes: input (batch, in_nodes), weight (in_nodes,).
    # Exercises the padded lane-dense fold (F=8 -> 128-wide rows).
    batch, in_nodes = 2, 8
    x = jax.random.normal(k1, (batch, in_nodes), dtype=jnp.float32)
    w = make_weight(in_nodes, k2)
    out = jax.block_until_ready(weight_sparse1_forward(x, w, force_pallas=True))
    assert out.shape == x.shape
    assert jnp.allclose(out, x * w[None, :], atol=1e-6, rtol=1e-6)

    # Exact lane-dense fold path (B*F divisible by lcm(F, 128)).
    x2 = jax.random.normal(k3, (512, 32), dtype=jnp.float32)
    w2 = make_weight(32, k4)
    out2 = jax.block_until_ready(weight_sparse1_forward(x2, w2, force_pallas=True))
    assert jnp.allclose(out2, x2 * w2[None, :], atol=1e-6, rtol=1e-6)

    # Natural Pallas path: multi-step batch grid (>= 8 steps, 4 MiB input).
    x3 = jax.random.normal(k5, (2048, 512), dtype=jnp.float32)
    w3 = make_weight(512, k6)
    out3 = jax.block_until_ready(weight_sparse1_forward(x3, w3))
    assert jnp.allclose(out3, x3 * w3[None, :], atol=1e-6, rtol=1e-6)

    # bf16 path: 16-row sublane rounding.
    x4 = jax.random.normal(k7, (256, 256), dtype=jnp.bfloat16)
    w4 = make_weight(256, k8)
    out4 = jax.block_until_ready(weight_sparse1_forward(x4, w4, force_pallas=True))
    ref4 = x4 * w4.astype(jnp.bfloat16)[None, :]
    assert jnp.allclose(out4.astype(jnp.float32), ref4.astype(jnp.float32))

    print("KERNEL_OK")
</pallas_src>

<mosaic_0001>
module attributes {stable_mosaic.version = 11 : i64} {
  func.func @_weight_sparse1_kernel(%arg0: i32, %arg1: i32, %arg2: memref<1x128xf32, #tpu.memory_space<vmem>>, %arg3: memref<1x128xf32, #tpu.memory_space<vmem>>, %arg4: memref<1x128xf32, #tpu.memory_space<vmem>>) attributes {dimension_semantics = [#tpu.dimension_semantics<parallel>, #tpu.dimension_semantics<parallel>], iteration_bounds = array<i64: 1, 1>, scalar_prefetch = 0 : i64, scratch_operands = 0 : i64, tpu.core_type = #tpu.core_type<tc>, window_params = [{transform_indices = @transform_0, window_bounds = array<i64: 1, 128>}, {transform_indices = @transform_1, window_bounds = array<i64: 1, 128>}, {transform_indices = @transform_2, window_bounds = array<i64: 1, 128>}]} {
    %c0 = arith.constant 0 : index
    %c0_0 = arith.constant 0 : index
    %0 = vector.load %arg2[%c0, %c0_0] : memref<1x128xf32, #tpu.memory_space<vmem>>, vector<1x128xf32>
    %c0_1 = arith.constant 0 : index
    %c0_2 = arith.constant 0 : index
    %1 = vector.load %arg3[%c0_1, %c0_2] : memref<1x128xf32, #tpu.memory_space<vmem>>, vector<1x128xf32>
    %2 = arith.mulf %0, %1 : vector<1x128xf32>
    %c0_3 = arith.constant 0 : index
    %c0_4 = arith.constant 0 : index
    %3 = vector.load %arg4[%c0_3, %c0_4] : memref<1x128xf32, #tpu.memory_space<vmem>>, vector<1x128xf32>
    tpu.vector_store %arg4[%c0_3, %c0_4], %2 {strides = array<i32>} : memref<1x128xf32, #tpu.memory_space<vmem>>, vector<1x128xf32>,
    return
  }
  func.func @transform_0(%arg0: i32, %arg1: i32) -> (i32, i32) {
    %c0_i32 = arith.constant 0 : i32
    return %arg0, %arg1 : i32, i32
  }
  func.func @transform_1(%arg0: i32, %arg1: i32) -> (i32, i32) {
    %c0_i32 = arith.constant 0 : i32
    %c0_i32_0 = arith.constant 0 : i32
    return %c0_i32, %arg1 : i32, i32
  }
  func.func @transform_2(%arg0: i32, %arg1: i32) -> (i32, i32) {
    %c0_i32 = arith.constant 0 : i32
    return %arg0, %arg1 : i32, i32
  }
}

</mosaic_0001>

<llo_original>
// kernel: tpu_custom_call.1
$region0: #{tpu_custom_call.1}
  #allocation0 [shape = 'u32[]', space=smem, size = 0x4, offset = 0x4, fixed_abs, tag = 'smem constant byte address 0x4 - core index']
  #allocation1 [shape = 'u32[144,128]{1,0:T(1,128)}', space=vmem, size = 0x12000, scoped, tag = 'internal scratch']
  %s0 = inlined_call_operand.hbm [shape: f32[1,128], index: 0, kind: input, shape index: {}]
  %s1 = inlined_call_operand.vmem [shape: f32[1,128], index: 1, kind: input, shape index: {}]
  %s2 = inlined_call_operand.hbm [shape: f32[1,128], index: 2, kind: output, shape index: {}]
  %s3 = sld [smem:[#allocation0]]
  $region22: #{tpu_custom_call.1} parent=0
    _
  %s5 = ssub.s32 1, %s3
  %s6 = scalar_select 0, %s5, %s3
  $region1: #{tpu_custom_call.1} parent=0
    #allocation2 [shape = 'u8[512]{0}', space=vmem, size = 0x400, scoped, tag = 'input window, operand 0, single buffered']
    #allocation3 [shape = 's32[1]{0}', space=sflag, size = 0x4, scoped, tag = 'scoped memory for tpu_custom_call.1']
    #allocation4 [shape = 's32[1]{0}', space=sflag, size = 0x4, scoped, tag = 'scoped memory for tpu_custom_call.1']
    #allocation5 [shape = 'u8[512]{0}', space=vmem, size = 0x400, scoped, tag = 'output window, operand 0, single buffered']
    %7 = vsyncpa [#allocation3], 0
    %8 = vsyncpa [#allocation4], 0
    // Predicated region
    $region2: #{tpu_custom_call.1} parent=1 // pred_check
      _
    $region3: #{tpu_custom_call.1} parent=1 // pred_check_branch
      %10 = sbr.rel (0) target = $region5
    $region4: #{tpu_custom_call.1} parent=1 // pred_region
      %s12 = ssub.s32 16, 16
      %13 = vsyncadd [#allocation3], %s12
      %s15 = sshll.u32 [#allocation2], 4
      %s16 = int_to_ptr.vmem [resolvable:$true] %s15
      %18 = dma.hbm_to_vmem [thread:$0]  %s0, 16, %s16, [#allocation3]
    $region5: #{tpu_custom_call.1} parent=1 // pred_fallthru
      _
    // Predicated region
    $region6: #{tpu_custom_call.1} parent=1 // pred_check
      _
    $region7: #{tpu_custom_call.1} parent=1 // pred_check_branch
      %20 = sbr.rel (0) target = $region9
    $region8: #{tpu_custom_call.1} parent=1 // pred_region
      _
    $region9: #{tpu_custom_call.1} parent=1 // pred_fallthru
      _
    // Predicated region
    $region10: #{tpu_custom_call.1} parent=1 // pred_check
      _
    $region11: #{tpu_custom_call.1} parent=1 // pred_check_branch
      %22 = sbr.rel (0) target = $region13
    $region12: #{tpu_custom_call.1} parent=1 // pred_region
      %23 = dma.done [#allocation3], 16
    $region13: #{tpu_custom_call.1} parent=1 // pred_fallthru
      _
    %v24 = vld [vmem:[#allocation2] sm:$0x1]
    %v25 = vld [vmem:[%s1] sm:$0x1]
    %v26 = vmul.f32 %v24, %v25
    %27 = vst [vmem:[#allocation5] sm:$0x1] %v26
    // Predicated region
    $region14: #{tpu_custom_call.1} parent=1 // pred_check
      _
    $region15: #{tpu_custom_call.1} parent=1 // pred_check_branch
      %29 = sbr.rel (0) target = $region17
    $region16: #{tpu_custom_call.1} parent=1 // pred_region
      %s31 = ssub.s32 16, 16
      %32 = vsyncadd [#allocation4], %s31
      %s34 = sshll.u32 [#allocation5], 4
      %s35 = int_to_ptr.vmem [resolvable:$true] %s34
      %37 = dma.vmem_to_hbm [thread:$0]  %s35, 16, %s2, [#allocation4]
    $region17: #{tpu_custom_call.1} parent=1 // pred_fallthru
      _
    // Predicated region
    $region18: #{tpu_custom_call.1} parent=1 // pred_check
      _
    $region19: #{tpu_custom_call.1} parent=1 // pred_check_branch
      %39 = sbr.rel (0) target = $region21
    $region20: #{tpu_custom_call.1} parent=1 // pred_region
      %40 = dma.done [#allocation4], 16
    $region21: #{tpu_custom_call.1} parent=1 // pred_fallthru
      _
    %41 = vsyncpa [#allocation3], 1
    %42 = vsyncpa [#allocation4], 1

</llo_original>
